<compile_context>
chip_gen: v5e
topology: v5e:2x2
jax: 0.10.0
libtpu: 0.0.40
codegen_flags: <defaults>
</compile_context>

<pallas_src>
import functools

import numpy as np
import jax
import jax.numpy as jnp
from jax.experimental import pallas as pl
from jax.experimental.pallas import tpu as pltpu

SPARSITY_THRESHOLD = 0.01
SCALE = 0.02


def _round_up(v, m):
    return (v + m - 1) // m * m


def _softshrink(x, lam):
    return jnp.where(x > lam, x - lam,
                     jnp.where(x < -lam, x + lam, jnp.zeros_like(x)))


def _make_kernel(bt, Dp, Tp):
    """Kernel for one (bt, 2*Dp, Tp) batch tile.

    Row layout per batch element: rows [0:Dp] = real channel, [Dp:2Dp] = imag.
    Tp is the zero-padded FFT length (multiple of 128).
    """
    D2 = 2 * Dp

    def kernel(x_ref, f2_ref, w1_ref, b1_ref, w2_ref, b2_ref, o_ref,
               s1_ref, y2_ref):
        f32, bf16 = jnp.float32, jnp.bfloat16
        dot = lambda a, b: jnp.dot(a, b, preferred_element_type=f32)

        f2 = f2_ref[...]                                    # (Tp, 2Tp) bf16

        # ---- stage 1: ortho FFT over T — ONE dot for the whole tile --------
        xb = x_ref[...].reshape(bt * D2, Tp)                # bf16, free reshape
        a = dot(xb, f2)                                     # (bt*2Dp, 2Tp) f32

        # Reorg FFT output to feature-major (2Dp, bt*Tp) with the complex
        # combine fused in.  Static loop: slice copies + VPU adds only.
        for b in range(bt):
            r0 = b * D2
            xr_fr = a[r0:r0 + Dp, :Tp]        # xr @ Fr
            xr_fi = a[r0:r0 + Dp, Tp:]        # xr @ Fi
            xi_fr = a[r0 + Dp:r0 + D2, :Tp]   # xi @ Fr
            xi_fi = a[r0 + Dp:r0 + D2, Tp:]   # xi @ Fi
            cols = slice(b * Tp, (b + 1) * Tp)
            s1_ref[:Dp, cols] = (xr_fr - xi_fi).astype(bf16)   # Re(FFT)
            s1_ref[Dp:, cols] = (xr_fi + xi_fr).astype(bf16)   # Im(FFT)

        # ---- stages 2+3: complex affines batched over all bt*Tp columns ----
        h = dot(w1_ref[...], s1_ref[...]) + b1_ref[...]     # (2Hp, bt*Tp) f32
        h = _softshrink(jnp.maximum(h, 0.0), SPARSITY_THRESHOLD)
        y = jnp.maximum(dot(w2_ref[...], h.astype(bf16)) + b2_ref[...], 0.0)
        yb = y.astype(bf16)                                 # (2Dp, bt*Tp)

        # Reorg back to row-stacked (bt*2Dp, Tp) via direct slice stores.
        for b in range(bt):
            y2_ref[b * D2:(b + 1) * D2, :] = yb[:, b * Tp:(b + 1) * Tp]

        # ---- stage 4: ortho IFFT = conj(F); sign folded into the combine ---
        c = dot(y2_ref[...], f2)                            # (bt*2Dp, 2Tp) f32
        for b in range(bt):
            r0 = b * D2
            yr_fr = c[r0:r0 + Dp, :Tp]
            yr_fi = c[r0:r0 + Dp, Tp:]
            yi_fr = c[r0 + Dp:r0 + D2, :Tp]
            yi_fi = c[r0 + Dp:r0 + D2, Tp:]
            o_ref[b, :Dp, :] = yr_fr + yi_fi                # Re(out)
            o_ref[b, Dp:, :] = yi_fr - yr_fi                # Im(out)

    return kernel


def _vmem_estimate(bt, Dp, Hp, Tp):
    """Rough per-grid-step VMEM footprint in bytes."""
    D2, H2 = 2 * Dp, 2 * Hp
    tiles = 2 * (bt * D2 * Tp * 2 + bt * D2 * Tp * 4)      # dbl-buffered in/out
    consts = 2 * (Tp * 2 * Tp * 2 + 2 * H2 * D2 * 2 + (H2 + D2) * 4)
    scratch = 2 * (D2 * bt * Tp * 2)                        # two bf16 scratches
    temps = 4 * (2 * bt * D2 * 2 * Tp                       # a / c (f32)
                 + 2 * H2 * bt * Tp                         # h pre/post act
                 + 2 * D2 * bt * Tp)                        # y, slack
    return tiles + consts + scratch + temps


def _pick_batch_tile(B, Dp, Hp, Tp, budget_bytes=20 * 2**20, max_bt=16):
    """Largest divisor of B fitting the VMEM budget, keeping >= 2 grid steps."""
    best = 1
    for bt in range(1, min(B, max_bt) + 1):
        if B % bt:
            continue
        if B >= 2 and B // bt < 2:          # keep both v7x TensorCores busy
            continue
        if _vmem_estimate(bt, Dp, Hp, Tp) <= budget_bytes:
            best = bt
    return best


@functools.partial(jax.jit, static_argnames=("batch_tile",))
def frets_block_forward(x, params, batch_tile=None):
    """x: (B, 2, D, T) float32  ->  (B, 2, D, T) float32."""
    r1, i1, rb1, ib1, r2, i2, rb2, ib2 = params
    B, N, D, T = x.shape
    assert N == 2, "channel axis must hold {real, imag}"
    H = r1.shape[1]

    # Lane/sublane-dense padded sizes (exactness preserved by zero padding).
    Dp = _round_up(D, 8)
    Hp = _round_up(H, 8)
    Tp = _round_up(T, 128)
    D2, H2 = 2 * Dp, 2 * Hp

    bt = _pick_batch_tile(B, Dp, Hp, Tp) if batch_tile is None else batch_tile
    assert B % bt == 0

    # Symmetric ortho DFT matrix F = exp(-2*pi*i*n*m/T)/sqrt(T), packed as one
    # (Tp, 2Tp) operand [Fr | Fi]; padded rows/cols are zero so padded lanes
    # are annihilated.  IFFT reuses the same operand (conj sign in-kernel).
    n = np.arange(T)
    ang = -2.0 * np.pi * np.outer(n, n) / T
    s = 1.0 / np.sqrt(T)
    f2_np = np.zeros((Tp, 2 * Tp), np.float32)
    f2_np[:T, :T] = np.cos(ang) * s
    f2_np[:T, Tp:Tp + T] = np.sin(ang) * s
    f2 = jnp.asarray(f2_np).astype(jnp.bfloat16)
    # TODO(synk): for very large production T, bf16 DFT rounding grows ~sqrt(T);
    # switch f2 to f32 (multi-pass MXU) if that exceeds the accuracy budget.

    def pad2(a, rows, cols):
        return jnp.pad(a, ((0, rows - a.shape[0]), (0, cols - a.shape[1])))

    r1p, i1p = pad2(r1, Dp, Hp), pad2(i1, Dp, Hp)
    r2p, i2p = pad2(r2, Hp, Dp), pad2(i2, Hp, Dp)
    rb1p = jnp.pad(rb1, (0, Hp - H))
    ib1p = jnp.pad(ib1, (0, Hp - H))
    rb2p = jnp.pad(rb2, (0, Dp - D))
    ib2p = jnp.pad(ib2, (0, Dp - D))

    # Block-real weights for the complex affines in feature-major layout:
    #   [Hr; Hi] = [[r^T, -i^T], [i^T, r^T]] @ [Zr; Zi]
    w1 = jnp.concatenate(
        [jnp.concatenate([r1p.T, -i1p.T], axis=1),
         jnp.concatenate([i1p.T, r1p.T], axis=1)], axis=0).astype(jnp.bfloat16)
    w2 = jnp.concatenate(
        [jnp.concatenate([r2p.T, -i2p.T], axis=1),
         jnp.concatenate([i2p.T, r2p.T], axis=1)], axis=0).astype(jnp.bfloat16)
    b1 = jnp.concatenate([rb1p, ib1p]).astype(jnp.float32).reshape(H2, 1)
    b2 = jnp.concatenate([rb2p, ib2p]).astype(jnp.float32).reshape(D2, 1)

    # (B,2,D,T) -> zero-pad -> (B, 2Dp, Tp) bf16; rows [0:Dp] real, [Dp:] imag.
    xpad = jnp.pad(x.astype(jnp.float32),
                   ((0, 0), (0, 0), (0, Dp - D), (0, Tp - T)))
    x2 = xpad.reshape(B, D2, Tp).astype(jnp.bfloat16)

    def const(shape):
        return pl.BlockSpec(shape, lambda g: (0,) * len(shape))

    tile = pl.BlockSpec((bt, D2, Tp), lambda g: (g, 0, 0))

    vmem_limit = int(min(60 * 2**20,
                         max(32 * 2**20, 2 * _vmem_estimate(bt, Dp, Hp, Tp))))

    out2 = pl.pallas_call(
        _make_kernel(bt, Dp, Tp),
        out_shape=jax.ShapeDtypeStruct((B, D2, Tp), jnp.float32),
        grid_spec=pltpu.PrefetchScalarGridSpec(
            num_scalar_prefetch=0,
            grid=(B // bt,),
            in_specs=[tile,
                      const((Tp, 2 * Tp)),
                      const((H2, D2)), const((H2, 1)),
                      const((D2, H2)), const((D2, 1))],
            out_specs=tile,
            scratch_shapes=[pltpu.VMEM((D2, bt * Tp), jnp.bfloat16),
                            pltpu.VMEM((bt * D2, Tp), jnp.bfloat16)]),
        compiler_params=pltpu.CompilerParams(
            dimension_semantics=("parallel",),
            vmem_limit_bytes=vmem_limit),
    )(x2, f2, w1, b1, w2, b2)

    return out2.reshape(B, 2, Dp, Tp)[:, :, :D, :T]


def reference_forward_np(x, params):
    """float64 numpy reference mirroring the PyTorch forward."""
    r1, i1, rb1, ib1, r2, i2, rb2, ib2 = [np.asarray(p, np.float64) for p in params]
    x = np.asarray(x, np.float64)
    xp = np.transpose(x, (0, 1, 3, 2))                  # (B, 2, T, D)
    xc = xp[:, 0] + 1j * xp[:, 1]                       # (B, T, D) complex
    Xf = np.fft.fft(xc, axis=1, norm='ortho')

    relu = lambda v: np.maximum(v, 0.0)

    def softshrink(v, lam=SPARSITY_THRESHOLD):
        return np.where(v > lam, v - lam, np.where(v < -lam, v + lam, 0.0))

    hr = softshrink(relu(Xf.real @ r1 - Xf.imag @ i1 + rb1))
    hi = softshrink(relu(Xf.imag @ r1 + Xf.real @ i1 + ib1))
    yr = relu(hr @ r2 - hi @ i2 + rb2)
    yi = relu(hi @ r2 + hr @ i2 + ib2)
    out = np.fft.ifft(yr + 1j * yi, axis=1, norm='ortho')
    out = np.stack([out.real, out.imag], axis=1)        # (B, 2, T, D)
    return np.transpose(out, (0, 1, 3, 2))              # (B, 2, D, T)


if __name__ == "__main__":
    B, T, D, H = 4, 8, 16, 32          # batch, seq, embed_size, hidden_size

    key = jax.random.PRNGKey(0)
    keys = jax.random.split(key, 9)

    x = jax.random.normal(keys[0], (B, 2, D, T), dtype=jnp.float32)
    params = (
        SCALE * jax.random.normal(keys[1], (D, H), dtype=jnp.float32),   # r1
        SCALE * jax.random.normal(keys[2], (D, H), dtype=jnp.float32),   # i1
        SCALE * jax.random.normal(keys[3], (H,), dtype=jnp.float32),     # rb1
        SCALE * jax.random.normal(keys[4], (H,), dtype=jnp.float32),     # ib1
        SCALE * jax.random.normal(keys[5], (H, D), dtype=jnp.float32),   # r2
        SCALE * jax.random.normal(keys[6], (H, D), dtype=jnp.float32),   # i2
        SCALE * jax.random.normal(keys[7], (D,), dtype=jnp.float32),     # rb2
        SCALE * jax.random.normal(keys[8], (D,), dtype=jnp.float32),     # ib2
    )

    out = jax.block_until_ready(frets_block_forward(x, params))
    assert out.shape == (B, 2, D, T), out.shape

    ref = reference_forward_np(x, params)
    # Tolerance sized for bf16 MXU operands with f32 accumulation.
    np.testing.assert_allclose(np.asarray(out, np.float64), ref,
                               atol=3e-3, rtol=2e-2)

    print("KERNEL_OK")
</pallas_src>

<mosaic_0001>
module attributes {stable_mosaic.version = 11 : i64} {
  func.func @kernel(%arg0: i32, %arg1: memref<2x32x128xbf16, #tpu.memory_space<vmem>>, %arg2: memref<128x256xbf16, #tpu.memory_space<vmem>>, %arg3: memref<64x32xbf16, #tpu.memory_space<vmem>>, %arg4: memref<64x1xf32, #tpu.memory_space<vmem>>, %arg5: memref<32x64xbf16, #tpu.memory_space<vmem>>, %arg6: memref<32x1xf32, #tpu.memory_space<vmem>>, %arg7: memref<2x32x128xf32, #tpu.memory_space<vmem>>, %arg8: memref<32x256xbf16, #tpu.memory_space<vmem>>, %arg9: memref<64x128xbf16, #tpu.memory_space<vmem>>) attributes {dimension_semantics = [#tpu.dimension_semantics<parallel>], iteration_bounds = array<i64: 2>, scalar_prefetch = 0 : i64, scratch_operands = 2 : i64, tpu.core_type = #tpu.core_type<tc>, window_params = [{transform_indices = @transform_0, window_bounds = array<i64: 2, 32, 128>}, {pipeline_mode = #tpu.pipeline_mode<synchronous>, transform_indices = @transform_1, window_bounds = array<i64: 128, 256>}, {pipeline_mode = #tpu.pipeline_mode<synchronous>, transform_indices = @transform_2, window_bounds = array<i64: 64, 32>}, {pipeline_mode = #tpu.pipeline_mode<synchronous>, transform_indices = @transform_3, window_bounds = array<i64: 64, 1>}, {pipeline_mode = #tpu.pipeline_mode<synchronous>, transform_indices = @transform_4, window_bounds = array<i64: 32, 64>}, {pipeline_mode = #tpu.pipeline_mode<synchronous>, transform_indices = @transform_5, window_bounds = array<i64: 32, 1>}, {transform_indices = @transform_6, window_bounds = array<i64: 2, 32, 128>}]} {
    %c0 = arith.constant 0 : index
    %c0_0 = arith.constant 0 : index
    %0 = vector.load %arg2[%c0, %c0_0] : memref<128x256xbf16, #tpu.memory_space<vmem>>, vector<128x256xbf16>
    %c0_1 = arith.constant 0 : index
    %c0_2 = arith.constant 0 : index
    %c0_3 = arith.constant 0 : index
    %1 = vector.load %arg1[%c0_1, %c0_2, %c0_3] : memref<2x32x128xbf16, #tpu.memory_space<vmem>>, vector<2x32x128xbf16>
    %2 = vector.shape_cast %1 : vector<2x32x128xbf16> to vector<64x128xbf16>
    %cst = arith.constant dense<0.000000e+00> : vector<64x256xf32>
    %3 = tpu.matmul %2, %0, %cst {dimension_numbers = #tpu.dot_dimension_numbers<[1], [0], [0], [1], [0, 0, 1, 1], [], []>} : vector<64x128xbf16>, vector<128x256xbf16>, vector<64x256xf32> -> vector<64x256xf32>
    %4 = vector.extract_strided_slice %3 {offsets = [0, 0], sizes = [16, 128], strides = [1, 1]} : vector<64x256xf32> to vector<16x128xf32>
    %5 = vector.extract_strided_slice %3 {offsets = [0, 128], sizes = [16, 128], strides = [1, 1]} : vector<64x256xf32> to vector<16x128xf32>
    %6 = vector.extract_strided_slice %3 {offsets = [16, 0], sizes = [16, 128], strides = [1, 1]} : vector<64x256xf32> to vector<16x128xf32>
    %7 = vector.extract_strided_slice %3 {offsets = [16, 128], sizes = [16, 128], strides = [1, 1]} : vector<64x256xf32> to vector<16x128xf32>
    %8 = arith.subf %4, %7 : vector<16x128xf32>
    %9 = arith.truncf %8 : vector<16x128xf32> to vector<16x128xbf16>
    %c0_4 = arith.constant 0 : index
    %c0_5 = arith.constant 0 : index
    %10 = vector.load %arg8[%c0_4, %c0_5] : memref<32x256xbf16, #tpu.memory_space<vmem>>, vector<16x128xbf16>
    tpu.vector_store %arg8[%c0_4, %c0_5], %9 {strides = array<i32>} : memref<32x256xbf16, #tpu.memory_space<vmem>>, vector<16x128xbf16>,
    %11 = arith.addf %5, %6 : vector<16x128xf32>
    %12 = arith.truncf %11 : vector<16x128xf32> to vector<16x128xbf16>
    %c16 = arith.constant 16 : index
    %c0_6 = arith.constant 0 : index
    %13 = vector.load %arg8[%c16, %c0_6] : memref<32x256xbf16, #tpu.memory_space<vmem>>, vector<16x128xbf16>
    tpu.vector_store %arg8[%c16, %c0_6], %12 {strides = array<i32>} : memref<32x256xbf16, #tpu.memory_space<vmem>>, vector<16x128xbf16>,
    %14 = vector.extract_strided_slice %3 {offsets = [32, 0], sizes = [16, 128], strides = [1, 1]} : vector<64x256xf32> to vector<16x128xf32>
    %15 = vector.extract_strided_slice %3 {offsets = [32, 128], sizes = [16, 128], strides = [1, 1]} : vector<64x256xf32> to vector<16x128xf32>
    %16 = vector.extract_strided_slice %3 {offsets = [48, 0], sizes = [16, 128], strides = [1, 1]} : vector<64x256xf32> to vector<16x128xf32>
    %17 = vector.extract_strided_slice %3 {offsets = [48, 128], sizes = [16, 128], strides = [1, 1]} : vector<64x256xf32> to vector<16x128xf32>
    %18 = arith.subf %14, %17 : vector<16x128xf32>
    %19 = arith.truncf %18 : vector<16x128xf32> to vector<16x128xbf16>
    %c0_7 = arith.constant 0 : index
    %c128 = arith.constant 128 : index
    %20 = vector.load %arg8[%c0_7, %c128] : memref<32x256xbf16, #tpu.memory_space<vmem>>, vector<16x128xbf16>
    tpu.vector_store %arg8[%c0_7, %c128], %19 {strides = array<i32>} : memref<32x256xbf16, #tpu.memory_space<vmem>>, vector<16x128xbf16>,
    %21 = arith.addf %15, %16 : vector<16x128xf32>
    %22 = arith.truncf %21 : vector<16x128xf32> to vector<16x128xbf16>
    %c16_8 = arith.constant 16 : index
    %c128_9 = arith.constant 128 : index
    %23 = vector.load %arg8[%c16_8, %c128_9] : memref<32x256xbf16, #tpu.memory_space<vmem>>, vector<16x128xbf16>
    tpu.vector_store %arg8[%c16_8, %c128_9], %22 {strides = array<i32>} : memref<32x256xbf16, #tpu.memory_space<vmem>>, vector<16x128xbf16>,
    %c0_10 = arith.constant 0 : index
    %c0_11 = arith.constant 0 : index
    %24 = vector.load %arg3[%c0_10, %c0_11] : memref<64x32xbf16, #tpu.memory_space<vmem>>, vector<64x32xbf16>
    %c0_12 = arith.constant 0 : index
    %c0_13 = arith.constant 0 : index
    %25 = vector.load %arg8[%c0_12, %c0_13] : memref<32x256xbf16, #tpu.memory_space<vmem>>, vector<32x256xbf16>
    %cst_14 = arith.constant dense<0.000000e+00> : vector<64x256xf32>
    %26 = tpu.matmul %24, %25, %cst_14 {dimension_numbers = #tpu.dot_dimension_numbers<[1], [0], [0], [1], [0, 0, 1, 1], [], []>} : vector<64x32xbf16>, vector<32x256xbf16>, vector<64x256xf32> -> vector<64x256xf32>
    %c0_15 = arith.constant 0 : index
    %c0_16 = arith.constant 0 : index
    %27 = vector.load %arg4[%c0_15, %c0_16] : memref<64x1xf32, #tpu.memory_space<vmem>>, vector<64x1xf32>
    %28 = vector.broadcast %27 : vector<64x1xf32> to vector<64x256xf32>
    %29 = arith.addf %26, %28 : vector<64x256xf32>
    %cst_17 = arith.constant 0.000000e+00 : f32
    %30 = vector.broadcast %cst_17 : f32 to vector<64x256xf32>
    %31 = arith.maximumf %29, %30 : vector<64x256xf32>
    %cst_18 = arith.constant 0.00999999977 : f32
    %32 = vector.broadcast %cst_18 : f32 to vector<64x256xf32>
    %33 = arith.cmpf ogt, %31, %32 : vector<64x256xf32>
    %cst_19 = arith.constant 0.00999999977 : f32
    %34 = vector.broadcast %cst_19 : f32 to vector<64x256xf32>
    %35 = arith.subf %31, %34 : vector<64x256xf32>
    %cst_20 = arith.constant -0.00999999977 : f32
    %36 = vector.broadcast %cst_20 : f32 to vector<64x256xf32>
    %37 = arith.cmpf olt, %31, %36 : vector<64x256xf32>
    %cst_21 = arith.constant 0.00999999977 : f32
    %38 = vector.broadcast %cst_21 : f32 to vector<64x256xf32>
    %39 = arith.addf %31, %38 : vector<64x256xf32>
    %cst_22 = arith.constant 0.000000e+00 : f32
    %40 = vector.broadcast %cst_22 : f32 to vector<64x256xf32>
    %41 = arith.select %37, %39, %40 : vector<64x256xi1>, vector<64x256xf32>
    %42 = arith.select %33, %35, %41 : vector<64x256xi1>, vector<64x256xf32>
    %c0_23 = arith.constant 0 : index
    %c0_24 = arith.constant 0 : index
    %43 = vector.load %arg5[%c0_23, %c0_24] : memref<32x64xbf16, #tpu.memory_space<vmem>>, vector<32x64xbf16>
    %44 = arith.truncf %42 : vector<64x256xf32> to vector<64x256xbf16>
    %cst_25 = arith.constant dense<0.000000e+00> : vector<32x256xf32>
    %45 = tpu.matmul %43, %44, %cst_25 {dimension_numbers = #tpu.dot_dimension_numbers<[1], [0], [0], [1], [0, 0, 1, 1], [], []>} : vector<32x64xbf16>, vector<64x256xbf16>, vector<32x256xf32> -> vector<32x256xf32>
    %c0_26 = arith.constant 0 : index
    %c0_27 = arith.constant 0 : index
    %46 = vector.load %arg6[%c0_26, %c0_27] : memref<32x1xf32, #tpu.memory_space<vmem>>, vector<32x1xf32>
    %47 = vector.broadcast %46 : vector<32x1xf32> to vector<32x256xf32>
    %48 = arith.addf %45, %47 : vector<32x256xf32>
    %cst_28 = arith.constant 0.000000e+00 : f32
    %49 = vector.broadcast %cst_28 : f32 to vector<32x256xf32>
    %50 = arith.maximumf %48, %49 : vector<32x256xf32>
    %51 = arith.truncf %50 : vector<32x256xf32> to vector<32x256xbf16>
    %52 = vector.extract_strided_slice %51 {offsets = [0, 0], sizes = [32, 128], strides = [1, 1]} : vector<32x256xbf16> to vector<32x128xbf16>
    %c0_29 = arith.constant 0 : index
    %c0_30 = arith.constant 0 : index
    %53 = vector.load %arg9[%c0_29, %c0_30] : memref<64x128xbf16, #tpu.memory_space<vmem>>, vector<32x128xbf16>
    tpu.vector_store %arg9[%c0_29, %c0_30], %52 {strides = array<i32>} : memref<64x128xbf16, #tpu.memory_space<vmem>>, vector<32x128xbf16>,
    %54 = vector.extract_strided_slice %51 {offsets = [0, 128], sizes = [32, 128], strides = [1, 1]} : vector<32x256xbf16> to vector<32x128xbf16>
    %c32 = arith.constant 32 : index
    %c0_31 = arith.constant 0 : index
    %55 = vector.load %arg9[%c32, %c0_31] : memref<64x128xbf16, #tpu.memory_space<vmem>>, vector<32x128xbf16>
    tpu.vector_store %arg9[%c32, %c0_31], %54 {strides = array<i32>} : memref<64x128xbf16, #tpu.memory_space<vmem>>, vector<32x128xbf16>,
    %c0_32 = arith.constant 0 : index
    %c0_33 = arith.constant 0 : index
    %56 = vector.load %arg9[%c0_32, %c0_33] : memref<64x128xbf16, #tpu.memory_space<vmem>>, vector<64x128xbf16>
    %cst_34 = arith.constant dense<0.000000e+00> : vector<64x256xf32>
    %57 = tpu.matmul %56, %0, %cst_34 {dimension_numbers = #tpu.dot_dimension_numbers<[1], [0], [0], [1], [0, 0, 1, 1], [], []>} : vector<64x128xbf16>, vector<128x256xbf16>, vector<64x256xf32> -> vector<64x256xf32>
    %58 = vector.extract_strided_slice %57 {offsets = [0, 0], sizes = [16, 128], strides = [1, 1]} : vector<64x256xf32> to vector<16x128xf32>
    %59 = vector.extract_strided_slice %57 {offsets = [0, 128], sizes = [16, 128], strides = [1, 1]} : vector<64x256xf32> to vector<16x128xf32>
    %60 = vector.extract_strided_slice %57 {offsets = [16, 0], sizes = [16, 128], strides = [1, 1]} : vector<64x256xf32> to vector<16x128xf32>
    %61 = vector.extract_strided_slice %57 {offsets = [16, 128], sizes = [16, 128], strides = [1, 1]} : vector<64x256xf32> to vector<16x128xf32>
    %62 = arith.addf %58, %61 : vector<16x128xf32>
    %c0_35 = arith.constant 0 : index
    %c0_36 = arith.constant 0 : index
    %c0_37 = arith.constant 0 : index
    %63 = vector.load %arg7[%c0_35, %c0_36, %c0_37] : memref<2x32x128xf32, #tpu.memory_space<vmem>>, vector<1x16x128xf32>
    %64 = vector.shape_cast %63 : vector<1x16x128xf32> to vector<16x128xf32>
    %65 = vector.shape_cast %62 : vector<16x128xf32> to vector<1x16x128xf32>
    tpu.vector_store %arg7[%c0_35, %c0_36, %c0_37], %65 {strides = array<i32>} : memref<2x32x128xf32, #tpu.memory_space<vmem>>, vector<1x16x128xf32>,
    %66 = arith.subf %60, %59 : vector<16x128xf32>
    %c0_38 = arith.constant 0 : index
    %c16_39 = arith.constant 16 : index
    %c0_40 = arith.constant 0 : index
    %67 = vector.load %arg7[%c0_38, %c16_39, %c0_40] : memref<2x32x128xf32, #tpu.memory_space<vmem>>, vector<1x16x128xf32>
    %68 = vector.shape_cast %67 : vector<1x16x128xf32> to vector<16x128xf32>
    %69 = vector.shape_cast %66 : vector<16x128xf32> to vector<1x16x128xf32>
    tpu.vector_store %arg7[%c0_38, %c16_39, %c0_40], %69 {strides = array<i32>} : memref<2x32x128xf32, #tpu.memory_space<vmem>>, vector<1x16x128xf32>,
    %70 = vector.extract_strided_slice %57 {offsets = [32, 0], sizes = [16, 128], strides = [1, 1]} : vector<64x256xf32> to vector<16x128xf32>
    %71 = vector.extract_strided_slice %57 {offsets = [32, 128], sizes = [16, 128], strides = [1, 1]} : vector<64x256xf32> to vector<16x128xf32>
    %72 = vector.extract_strided_slice %57 {offsets = [48, 0], sizes = [16, 128], strides = [1, 1]} : vector<64x256xf32> to vector<16x128xf32>
    %73 = vector.extract_strided_slice %57 {offsets = [48, 128], sizes = [16, 128], strides = [1, 1]} : vector<64x256xf32> to vector<16x128xf32>
    %74 = arith.addf %70, %73 : vector<16x128xf32>
    %c1 = arith.constant 1 : index
    %c0_41 = arith.constant 0 : index
    %c0_42 = arith.constant 0 : index
    %75 = vector.load %arg7[%c1, %c0_41, %c0_42] : memref<2x32x128xf32, #tpu.memory_space<vmem>>, vector<1x16x128xf32>
    %76 = vector.shape_cast %75 : vector<1x16x128xf32> to vector<16x128xf32>
    %77 = vector.shape_cast %74 : vector<16x128xf32> to vector<1x16x128xf32>
    tpu.vector_store %arg7[%c1, %c0_41, %c0_42], %77 {strides = array<i32>} : memref<2x32x128xf32, #tpu.memory_space<vmem>>, vector<1x16x128xf32>,
    %78 = arith.subf %72, %71 : vector<16x128xf32>
    %c1_43 = arith.constant 1 : index
    %c16_44 = arith.constant 16 : index
    %c0_45 = arith.constant 0 : index
    %79 = vector.load %arg7[%c1_43, %c16_44, %c0_45] : memref<2x32x128xf32, #tpu.memory_space<vmem>>, vector<1x16x128xf32>
    %80 = vector.shape_cast %79 : vector<1x16x128xf32> to vector<16x128xf32>
    %81 = vector.shape_cast %78 : vector<16x128xf32> to vector<1x16x128xf32>
    tpu.vector_store %arg7[%c1_43, %c16_44, %c0_45], %81 {strides = array<i32>} : memref<2x32x128xf32, #tpu.memory_space<vmem>>, vector<1x16x128xf32>,
    return
  }
  func.func @transform_0(%arg0: i32) -> (i32, i32, i32) {
    %c0_i32 = arith.constant 0 : i32
    %c0_i32_0 = arith.constant 0 : i32
    %c0_i32_1 = arith.constant 0 : i32
    return %arg0, %c0_i32, %c0_i32_0 : i32, i32, i32
  }
  func.func @transform_1(%arg0: i32) -> (i32, i32) {
    %c0_i32 = arith.constant 0 : i32
    %c0_i32_0 = arith.constant 0 : i32
    %c0_i32_1 = arith.constant 0 : i32
    return %c0_i32, %c0_i32_0 : i32, i32
  }
  func.func @transform_2(%arg0: i32) -> (i32, i32) {
    %c0_i32 = arith.constant 0 : i32
    %c0_i32_0 = arith.constant 0 : i32
    %c0_i32_1 = arith.constant 0 : i32
    return %c0_i32, %c0_i32_0 : i32, i32
  }
  func.func @transform_3(%arg0: i32) -> (i32, i32) {
    %c0_i32 = arith.constant 0 : i32
    %c0_i32_0 = arith.constant 0 : i32
    %c0_i32_1 = arith.constant 0 : i32
    return %c0_i32, %c0_i32_0 : i32, i32
  }
  func.func @transform_4(%arg0: i32) -> (i32, i32) {
    %c0_i32 = arith.constant 0 : i32
    %c0_i32_0 = arith.constant 0 : i32
    %c0_i32_1 = arith.constant 0 : i32
    return %c0_i32, %c0_i32_0 : i32, i32
  }
  func.func @transform_5(%arg0: i32) -> (i32, i32) {
    %c0_i32 = arith.constant 0 : i32
    %c0_i32_0 = arith.constant 0 : i32
    %c0_i32_1 = arith.constant 0 : i32
    return %c0_i32, %c0_i32_0 : i32, i32
  }
  func.func @transform_6(%arg0: i32) -> (i32, i32, i32) {
    %c0_i32 = arith.constant 0 : i32
    %c0_i32_0 = arith.constant 0 : i32
    %c0_i32_1 = arith.constant 0 : i32
    return %arg0, %c0_i32, %c0_i32_0 : i32, i32, i32
  }
}

</mosaic_0001>

<llo_original>
// kernel: neg.0
$region0: #{neg.0}
  #allocation0 [shape = 's32[1]{0}', space=sflag, size = 0x4, scoped, tag = 'scoped memory for neg.0']
  %s0 = inlined_call_operand.vmem [shape: f32[16,32], index: 0, kind: input, shape index: {}]
  %s1 = inlined_call_operand.vmem [shape: bf16[16,32], index: 1, kind: output, shape index: {}]
  %v2 = vld [vmem:[%s0] sm:$0xff]
  %3 = xla_tuple %v2
  %4 = xla_tuple %3
  %v5 = vxor.u32 %v2, 2147483648
  %6 = xla_tuple %v5
  %v7 = vpack.c.bf16 0.0, %v5
  %8 = vst [vmem:[%s1] sm:$0xf] %v7
  %s9 = scalar_lea.vmem %s0, 8
  %v10 = vld [vmem:[%s9] sm:$0xff]
  %11 = xla_tuple %v10
  %12 = xla_tuple %11
  %v13 = vxor.u32 %v10, 2147483648
  %14 = xla_tuple %v13
  %s15 = scalar_lea.vmem %s1, 4
  %v16 = vpack.c.bf16 0.0, %v13
  %17 = vst [vmem:[%s15] sm:$0xf] %v16

// kernel: frets_block_forward.1
$region0: #{frets_block_forward.1}
  #allocation0 [shape = 'u32[]', space=smem, size = 0x4, offset = 0x4, fixed_abs, tag = 'smem constant byte address 0x4 - core index']
  #allocation1 [shape = 'u32[72,128]{1,0:T(1,128)}', space=vmem, size = 0x9000, scoped, tag = 'internal scratch']
  #allocation2 [shape = 'bf16[32,256]{1,0:T(8,128)(2,1)}', space=vmem, size = 0x4000, scoped, tag = 'scratch operand']
  #allocation3 [shape = 'bf16[64,128]{1,0:T(8,128)(2,1)}', space=vmem, size = 0x4000, scoped, tag = 'scratch operand']
  %s0 = inlined_call_operand.vmem [shape: bf16[4,32,128], index: 0, kind: input, shape index: {}]
  %s1 = inlined_call_operand.vmem [shape: bf16[128,256], index: 1, kind: input, shape index: {}]
  %s2 = inlined_call_operand.vmem [shape: bf16[64,32], index: 2, kind: input, shape index: {}]
  %s3 = inlined_call_operand.vmem [shape: f32[64,1], index: 3, kind: input, shape index: {}]
  %s4 = inlined_call_operand.vmem [shape: bf16[32,64], index: 4, kind: input, shape index: {}]
  %s5 = inlined_call_operand.vmem [shape: f32[32,1], index: 5, kind: input, shape index: {}]
  %s6 = inlined_call_operand.vmem [shape: f32[4,32,128], index: 6, kind: output, shape index: {}]
  %s7 = sld [smem:[#allocation0]]
  $region57: #{frets_block_forward.1} parent=0
    _
  %s9 = ssub.s32 1, %s7
  %s10 = scalar_select 0, %s9, %s7
  loop: start=0, step=1, limit=4
  $region2: #{frets_block_forward.1} parent=0 // loop_pre_header
    _
  $region3: #{frets_block_forward.1} parent=0 // loop_header
    %s12 = sphi 0, %s16
    %p13 = scmp.ge.s32.totalorder %s12, 4
    %s22 = sphi 0, %s24
    %s25 = sphi 0, %s22
    %s26 = sphi 0, %s25
    %s42 = sphi 0, %s26
    %s46 = sphi 0, %s46
    %s48 = sphi 0, %s46
    %s49 = sphi 0, %s48
    %s63 = sphi 0, %s49
    %s67 = sphi 0, %s67
    %s69 = sphi 0, %s67
    %s70 = sphi 0, %s69
    %s84 = sphi 0, %s70
    %s88 = sphi 0, %s88
    %s90 = sphi 0, %s88
    %s91 = sphi 0, %s90
    %s105 = sphi 0, %s91
    %s109 = sphi 0, %s109
    %s111 = sphi 0, %s109
    %s112 = sphi 0, %s111
    %s126 = sphi 0, %s112
    %s130 = sphi 0, %s130
    %s132 = sphi 0, %s130
    %s133 = sphi 0, %s132
    %s147 = sphi 0, %s133
    %s153 = sphi 0, %s155
    %s156 = sphi 0, %s153
    %s157 = sphi 0, %s156
    %s173 = sphi 0, %s157
  $region4: #{frets_block_forward.1} parent=0 // loop_header_branch
    %15 = sbr.rel (%p13) target = $region8
  $region5: #{frets_block_forward.1} parent=0 // loop_body
    %s17 = ssub.s32 %s12, 1
    %s18 = ssub.s32 %s12, 2
    %s19 = sadd.s32 %s12, 1
    %s20 = ssub.s32 %s12, %s19
    %p21 = scmp.eq.s32.totalorder %s20, 0
    %s23 = sadd.s32 %s22, 1
    %s24 = scalar_select %p21, %s22, %s23
    %p27 = pneg %p21
    %p28 = scmp.eq.s32.totalorder %s12, 1
    %p29 = por %p27, %p28
    %p30 = scmp.ne.s32.totalorder %s22, %s25
    %p31 = scmp.eq.s32.totalorder %s12, 0
    %p32 = por %p30, %p31
    %p33 = scmp.ne.s32.totalorder %s22, %s25
    %p34 = scmp.eq.s32.totalorder %s17, 1
    %p35 = por %p33, %p34
    %p36 = scmp.ne.s32.totalorder %s25, %s26
    %p37 = scmp.eq.s32.totalorder %s17, 0
    %p38 = por %p36, %p37
    %p39 = scmp.ne.s32.totalorder %s25, %s26
    %p40 = scmp.eq.s32.totalorder %s18, 1
    %p41 = por %p39, %p40
    %p43 = scmp.ne.s32.totalorder %s26, %s42
    %p44 = scmp.eq.s32.totalorder %s18, 0
    %p45 = por %p43, %p44
    %s47 = sadd.s32 %s46, 1
    %p50 = scmp.eq.s32.totalorder %s12, 1
    %p51 = scmp.ne.s32.totalorder %s46, %s48
    %p52 = scmp.eq.s32.totalorder %s12, 0
    %p53 = por %p51, %p52
    %p54 = scmp.ne.s32.totalorder %s46, %s48
    %p55 = scmp.eq.s32.totalorder %s17, 1
    %p56 = por %p54, %p55
    %p57 = scmp.ne.s32.totalorder %s48, %s49
    %p58 = scmp.eq.s32.totalorder %s17, 0
    %p59 = por %p57, %p58
    %p60 = scmp.ne.s32.totalorder %s48, %s49
    %p61 = scmp.eq.s32.totalorder %s18, 1
    %p62 = por %p60, %p61
    %p64 = scmp.ne.s32.totalorder %s49, %s63
    %p65 = scmp.eq.s32.totalorder %s18, 0
    %p66 = por %p64, %p65
    %s68 = sadd.s32 %s67, 1
    %p71 = scmp.eq.s32.totalorder %s12, 1
    %p72 = scmp.ne.s32.totalorder %s67, %s69
    %p73 = scmp.eq.s32.totalorder %s12, 0
    %p74 = por %p72, %p73
    %p75 = scmp.ne.s32.totalorder %s67, %s69
    %p76 = scmp.eq.s32.totalorder %s17, 1
    %p77 = por %p75, %p76
    %p78 = scmp.ne.s32.totalorder %s69, %s70
    %p79 = scmp.eq.s32.totalorder %s17, 0
    %p80 = por %p78, %p79
    %p81 = scmp.ne.s32.totalorder %s69, %s70
    %p82 = scmp.eq.s32.totalorder %s18, 1
    %p83 = por %p81, %p82
    %p85 = scmp.ne.s32.totalorder %s70, %s84
    %p86 = scmp.eq.s32.totalorder %s18, 0
    %p87 = por %p85, %p86
    %s89 = sadd.s32 %s88, 1
    %p92 = scmp.eq.s32.totalorder %s12, 1
    %p93 = scmp.ne.s32.totalorder %s88, %s90
    %p94 = scmp.eq.s32.totalorder %s12, 0
    %p95 = por %p93, %p94
    %p96 = scmp.ne.s32.totalorder %s88, %s90
    %p97 = scmp.eq.s32.totalorder %s17, 1
    %p98 = por %p96, %p97
    %p99 = scmp.ne.s32.totalorder %s90, %s91
    %p100 = scmp.eq.s32.totalorder %s17, 0
    %p101 = por %p99, %p100
    %p102 = scmp.ne.s32.totalorder %s90, %s91
    %p103 = scmp.eq.s32.totalorder %s18, 1
    %p104 = por %p102, %p103
    %p106 = scmp.ne.s32.totalorder %s91, %s105
    %p107 = scmp.eq.s32.totalorder %s18, 0
    %p108 = por %p106, %p107
    %s110 = sadd.s32 %s109, 1
    %p113 = scmp.eq.s32.totalorder %s12, 1
    %p114 = scmp.ne.s32.totalorder %s109, %s111
    %p115 = scmp.eq.s32.totalorder %s12, 0
    %p116 = por %p114, %p115
    %p117 = scmp.ne.s32.totalorder %s109, %s111
    %p118 = scmp.eq.s32.totalorder %s17, 1
    %p119 = por %p117, %p118
    %p120 = scmp.ne.s32.totalorder %s111, %s112
    %p121 = scmp.eq.s32.totalorder %s17, 0
    %p122 = por %p120, %p121
    %p123 = scmp.ne.s32.totalorder %s111, %s112
    %p124 = scmp.eq.s32.totalorder %s18, 1
    %p125 = por %p123, %p124
    %p127 = scmp.ne.s32.totalorder %s112, %s126
    %p128 = scmp.eq.s32.totalorder %s18, 0
    %p129 = por %p127, %p128
    %s131 = sadd.s32 %s130, 1
    %p134 = scmp.eq.s32.totalorder %s12, 1
    %p135 = scmp.ne.s32.totalorder %s130, %s132
    %p136 = scmp.eq.s32.totalorder %s12, 0
    %p137 = por %p135, %p136
    %p138 = scmp.ne.s32.totalorder %s130, %s132
    %p139 = scmp.eq.s32.totalorder %s17, 1
    %p140 = por %p138, %p139
    %p141 = scmp.ne.s32.totalorder %s132, %s133
    %p142 = scmp.eq.s32.totalorder %s17, 0
    %p143 = por %p141, %p142
    %p144 = scmp.ne.s32.totalorder %s132, %s133
    %p145 = scmp.eq.s32.totalorder %s18, 1
    %p146 = por %p144, %p145
    %p148 = scmp.ne.s32.totalorder %s133, %s147
    %p149 = scmp.eq.s32.totalorder %s18, 0
    %p150 = por %p148, %p149
    %s151 = ssub.s32 %s12, %s19
    %p152 = scmp.eq.s32.totalorder %s151, 0
    %s154 = sadd.s32 %s153, 1
    %s155 = scalar_select %p152, %s153, %s154
    %p158 = pneg %p152
    %p159 = scmp.eq.s32.totalorder %s12, 1
    %p160 = por %p158, %p159
    %p161 = scmp.ne.s32.totalorder %s153, %s156
    %p162 = scmp.eq.s32.totalorder %s12, 0
    %p163 = por %p161, %p162
    %p164 = scmp.ne.s32.totalorder %s153, %s156
    %p165 = scmp.eq.s32.totalorder %s17, 1
    %p166 = por %p164, %p165
    %p167 = scmp.ne.s32.totalorder %s156, %s157
    %p168 = scmp.eq.s32.totalorder %s17, 0
    %p169 = por %p167, %p168
    %p170 = scmp.ne.s32.totalorder %s156, %s157
    %p171 = scmp.eq.s32.totalorder %s18, 1
    %p172 = por %p170, %p171
    %p174 = scmp.ne.s32.totalorder %s157, %s173
    %p175 = scmp.eq.s32.totalorder %s18, 0
    %p176 = por %p174, %p175
    %p177 = scmp.le.s32.totalorder 1, %s12
    %p178 = scmp.lt.s32.totalorder %s12, 3
    %p179 = pnand %p177, %p178
    %p180 = pneg %p179
    // Predicated region
    $region9: #{frets_block_forward.1} parent=5 // pred_check
      _
    $region10: #{frets_block_forward.1} parent=5 // pred_check_branch
      %182 = sbr.rel (%p179) target = $region12
    $region11: #{frets_block_forward.1} parent=5 // pred_region
      %s183 = ssub.s32 %s12, 1
      // Predicated region
      $region13: #{frets_block_forward.1} parent=11 // pred_check
        %p184 = pneg %p59
      $region14: #{frets_block_forward.1} parent=11 // pred_check_branch
        %186 = sbr.rel (%p184) target = $region16
      $region15: #{frets_block_forward.1} parent=11 // pred_region
        _
      $region16: #{frets_block_forward.1} parent=11 // pred_fallthru
        _
      // Predicated region
      $region17: #{frets_block_forward.1} parent=11 // pred_check
        %p187 = pneg %p80
      $region18: #{frets_block_forward.1} parent=11 // pred_check_branch
        %189 = sbr.rel (%p187) target = $region20
      $region19: #{frets_block_forward.1} parent=11 // pred_region
        _
      $region20: #{frets_block_forward.1} parent=11 // pred_fallthru
        _
      // Predicated region
      $region21: #{frets_block_forward.1} parent=11 // pred_check
        %p190 = pneg %p101
      $region22: #{frets_block_forward.1} parent=11 // pred_check_branch
        %192 = sbr.rel (%p190) target = $region24
      $region23: #{frets_block_forward.1} parent=11 // pred_region
        _
      $region24: #{frets_block_forward.1} parent=11 // pred_fallthru
        _
      // Predicated region
      $region25: #{frets_block_forward.1} parent=11 // pred_check
        %p193 = pneg %p122
      $region26: #{frets_block_forward.1} parent=11 // pred_check_branch
        %195 = sbr.rel (%p193) target = $region28
      $region27: #{frets_block_forward.1} parent=11 // pred_region
        _
      $region28: #{frets_block_forward.1} parent=11 // pred_fallthru
        _
      // Predicated region
      $region29: #{frets_block_forward.1} parent=11 // pred_check
        %p196 = pneg %p143
      $region30: #{frets_block_forward.1} parent=11 // pred_check_branch
        %198 = sbr.rel (%p196) target = $region32
      $region31: #{frets_block_forward.1} parent=11 // pred_region
        _
      $region32: #{frets_block_forward.1} parent=11 // pred_fallthru
        _
    $region12: #{frets_block_forward.1} parent=5 // pred_fallthru
      _
    %p199 = scmp.lt.s32.totalorder %s12, 2
    // Predicated region
    $region33: #{frets_block_forward.1} parent=5 // pred_check
      %p200 = pneg %p199
    $region34: #{frets_block_forward.1} parent=5 // pred_check_branch
      %202 = sbr.rel (%p200) target = $region36
    $region35: #{frets_block_forward.1} parent=5 // pred_region
      // Predicated region
      $region37: #{frets_block_forward.1} parent=35 // pred_check
        %p203 = pneg %p32
      $region38: #{frets_block_forward.1} parent=35 // pred_check_branch
        %205 = sbr.rel (%p203) target = $region40
      $region39: #{frets_block_forward.1} parent=35 // pred_region
        %s206 = smul.u32 2, %s12
        %p207 = scmp.lt.s32.totalorder %s206, 3
        %s208 = scalar_select %p207, %s206, 3
        %s209 = smul.addr %s208, 4
        %s210 = smul.addr %s209, 4
        %s211 = scalar_lea.vmem %s0, %s210
        %s212 = smul.u32 2, %s12
      $region40: #{frets_block_forward.1} parent=35 // pred_fallthru
        _
    $region36: #{frets_block_forward.1} parent=5 // pred_fallthru
      _
    %p213 = scmp.le.s32.totalorder 1, %s12
    %p214 = scmp.lt.s32.totalorder %s12, 3
    %p215 = pnand %p213, %p214
    %p216 = pneg %p215
    // Predicated region
    $region41: #{frets_block_forward.1} parent=5 // pred_check
      _
    $region42: #{frets_block_forward.1} parent=5 // pred_check_branch
      %218 = sbr.rel (%p215) target = $region44
    $region43: #{frets_block_forward.1} parent=5 // pred_region
      %s219 = ssub.s32 %s12, 1
      %s220 = smul.u32 2, %s17
      %p221 = scmp.lt.s32.totalorder %s220, 3
      %s222 = scalar_select %p221, %s220, 3
      %s223 = smul.addr %s222, 4
      %s224 = smul.addr %s223, 4
      %s225 = scalar_lea.vmem %s0, %s224
      %p226 = pneg %p38
      %p227 = pneg %p35
      %p228 = pneg %p59
      %p229 = pneg %p56
      %p230 = pneg %p80
      %p231 = pneg %p77
      %p232 = pneg %p101
      %p233 = pneg %p98
      %p234 = pneg %p122
      %p235 = pneg %p119
      %p236 = pneg %p143
      %p237 = pneg %p140
      %p238 = pneg %p169
      %p239 = pneg %p166
      %s240 = smul.u32 2, %s17
      %p241 = scmp.lt.s32.totalorder %s240, 3
      %s242 = scalar_select %p241, %s240, 3
      %s243 = smul.addr %s242, 4
      %s244 = smul.addr %s243, 8
      %s245 = scalar_lea.vmem %s6, %s244
      %s246 = smul.u32 2, %s17
      %p247 = scmp.lt.s32.totalorder %s246, 3
      %s248 = scalar_select %p247, %s246, 3
      %s249 = smul.addr %s248, 4
      %s250 = smul.addr %s249, 4
      %s251 = scalar_lea.vmem %s0, %s250
      %s252 = smul.u32 2, %s17
      %s253 = smul.u32 2, %s17
      %p254 = scmp.lt.s32.totalorder %s253, 3
      %s255 = scalar_select %p254, %s253, 3
      %s256 = smul.addr %s255, 4
      %s257 = smul.addr %s256, 8
      %s258 = scalar_lea.vmem %s6, %s257
      %s259 = smul.u32 2, %s17
      %v261 = vld [vmem:[%s1] sm:$0xff]
      %v262 = vld [vmem:[%s1 + $0x8] sm:$0xff]
      %v263 = vld [vmem:[%s1 + $0x10] sm:$0xff]
      %v264 = vld [vmem:[%s1 + $0x18] sm:$0xff]
      %v265 = vld [vmem:[%s1 + $0x20] sm:$0xff]
      %v266 = vld [vmem:[%s1 + $0x28] sm:$0xff]
      %v267 = vld [vmem:[%s1 + $0x30] sm:$0xff]
      %v268 = vld [vmem:[%s1 + $0x38] sm:$0xff]
      %v269 = vld [vmem:[%s1 + $0x40] sm:$0xff]
      %v270 = vld [vmem:[%s1 + $0x48] sm:$0xff]
      %v271 = vld [vmem:[%s1 + $0x50] sm:$0xff]
      %v272 = vld [vmem:[%s1 + $0x58] sm:$0xff]
      %v273 = vld [vmem:[%s1 + $0x60] sm:$0xff]
      %v274 = vld [vmem:[%s1 + $0x68] sm:$0xff]
      %v275 = vld [vmem:[%s1 + $0x70] sm:$0xff]
      %v276 = vld [vmem:[%s1 + $0x78] sm:$0xff]
      %v277 = vld [vmem:[%s251] sm:$0xf]
      %v278 = vld [vmem:[%s251 + $0x4] sm:$0xf]
      %v279 = vld [vmem:[%s251 + $0x8] sm:$0xf]
      %v280 = vld [vmem:[%s251 + $0xc] sm:$0xf]
      %v281 = vld [vmem:[%s251 + $0x10] sm:$0xf]
      %v282 = vld [vmem:[%s251 + $0x14] sm:$0xf]
      %v283 = vld [vmem:[%s251 + $0x18] sm:$0xf]
      %v284 = vld [vmem:[%s251 + $0x1c] sm:$0xf]
      %v293 = vunpack.c.l.b16 %v277
      %v294 = vunpack.c.l.b16 %v278
      %v295 = vunpack.c.l.b16 %v279
      %v296 = vunpack.c.l.b16 %v280
      %v297 = vunpack.c.l.b16 %v281
      %v298 = vunpack.c.l.b16 %v282
      %v299 = vunpack.c.l.b16 %v283
      %v300 = vunpack.c.l.b16 %v284
      %v301 = vpack.c.b16 %v294, %v293
      %v302 = vpack.c.b16 %v296, %v295
      %v303 = vpack.c.b16 %v298, %v297
      %v304 = vpack.c.b16 %v300, %v299
      %v325 = vunpack.c.l.b16 %v261
      %v326 = vunpack.c.h.b16 %v261
      %v327 = vunpack.c.l.b16 %v262
      %v328 = vunpack.c.h.b16 %v262
      %v329 = vunpack.c.l.b16 %v263
      %v330 = vunpack.c.h.b16 %v263
      %v331 = vunpack.c.l.b16 %v264
      %v332 = vunpack.c.h.b16 %v264
      %v333 = vunpack.c.l.b16 %v265
      %v334 = vunpack.c.h.b16 %v265
      %v335 = vunpack.c.l.b16 %v266
      %v336 = vunpack.c.h.b16 %v266
      %v337 = vunpack.c.l.b16 %v267
      %v338 = vunpack.c.h.b16 %v267
      %v339 = vunpack.c.l.b16 %v268
      %v340 = vunpack.c.h.b16 %v268
      %v341 = vunpack.c.l.b16 %v269
      %v342 = vunpack.c.h.b16 %v269
      %v343 = vunpack.c.l.b16 %v270
      %v344 = vunpack.c.h.b16 %v270
      %v345 = vunpack.c.l.b16 %v271
      %v346 = vunpack.c.h.b16 %v271
      %v347 = vunpack.c.l.b16 %v272
      %v348 = vunpack.c.h.b16 %v272
      %v349 = vunpack.c.l.b16 %v273
      %v350 = vunpack.c.h.b16 %v273
      %v351 = vunpack.c.l.b16 %v274
      %v352 = vunpack.c.h.b16 %v274
      %v353 = vunpack.c.l.b16 %v275
      %v354 = vunpack.c.h.b16 %v275
      %v355 = vunpack.c.l.b16 %v276
      %v356 = vunpack.c.h.b16 %v276
      %v357 = vpack.c.b16 %v327, %v325
      %v358 = vpack.c.b16 %v328, %v326
      %v359 = vpack.c.b16 %v331, %v329
      %v360 = vpack.c.b16 %v332, %v330
      %v361 = vpack.c.b16 %v335, %v333
      %v362 = vpack.c.b16 %v336, %v334
      %v363 = vpack.c.b16 %v339, %v337
      %v364 = vpack.c.b16 %v340, %v338
      %v365 = vpack.c.b16 %v343, %v341
      %v366 = vpack.c.b16 %v344, %v342
      %v367 = vpack.c.b16 %v347, %v345
      %v368 = vpack.c.b16 %v348, %v346
      %v369 = vpack.c.b16 %v351, %v349
      %v370 = vpack.c.b16 %v352, %v350
      %v371 = vpack.c.b16 %v355, %v353
      %v372 = vpack.c.b16 %v356, %v354
      %389 = vmatpush.bf16.msra.mxu0 %v371
      %390 = vmatpush.bf16.msra.mxu0 %v369
      %391 = vmatpush.bf16.msra.mxu0 %v367
      %392 = vmatpush.bf16.msra.mxu0 %v365
      %393 = vmatpush.bf16.msra.mxu0 %v363
      %394 = vmatpush.bf16.msra.mxu0 %v361
      %395 = vmatpush.bf16.msra.mxu0 %v359
      %396 = vmatpush.bf16.msra.mxu0 %v357
      %397 = vmatmul.bf16.gmra.mxu0 %v301
      %v398 = vpop.f32.mrf.mxu0
      %v399 = vadd.f32 0.0, %v398
      %v400 = vpop.f32.mrf.mxu0
      %v401 = vadd.f32 0.0, %v400
      %402 = vmatmul.bf16.gmra.mxu0 %v302
      %v403 = vpop.f32.mrf.mxu0
      %v404 = vadd.f32 0.0, %v403
      %v405 = vpop.f32.mrf.mxu0
      %v406 = vadd.f32 0.0, %v405
      %407 = vmatmul.bf16.gmra.mxu0 %v303
      %v408 = vpop.f32.mrf.mxu0
      %v409 = vadd.f32 0.0, %v408
      %v410 = vpop.f32.mrf.mxu0
      %v411 = vadd.f32 0.0, %v410
      %412 = vmatmul.bf16.gmra.mxu0 %v304
      %v413 = vpop.f32.mrf.mxu0
      %v414 = vadd.f32 0.0, %v413
      %v415 = vpop.f32.mrf.mxu0
      %v416 = vadd.f32 0.0, %v415
      %417 = vdwg.mxu0
      %418 = vmatpush.bf16.msra.mxu0 %v372
      %419 = vmatpush.bf16.msra.mxu0 %v370
      %420 = vmatpush.bf16.msra.mxu0 %v368
      %421 = vmatpush.bf16.msra.mxu0 %v366
      %422 = vmatpush.bf16.msra.mxu0 %v364
      %423 = vmatpush.bf16.msra.mxu0 %v362
      %424 = vmatpush.bf16.msra.mxu0 %v360
      %425 = vmatpush.bf16.msra.mxu0 %v358
      %426 = vmatmul.bf16.gmra.mxu0 %v301
      %v427 = vpop.f32.mrf.mxu0
      %v428 = vadd.f32 0.0, %v427
      %v429 = vpop.f32.mrf.mxu0
      %v430 = vadd.f32 0.0, %v429
      %431 = vmatmul.bf16.gmra.mxu0 %v302
      %v432 = vpop.f32.mrf.mxu0
      %v433 = vadd.f32 0.0, %v432
      %v434 = vpop.f32.mrf.mxu0
      %v435 = vadd.f32 0.0, %v434
      %436 = vmatmul.bf16.gmra.mxu0 %v303
      %v437 = vpop.f32.mrf.mxu0
      %v438 = vadd.f32 0.0, %v437
      %v439 = vpop.f32.mrf.mxu0
      %v440 = vadd.f32 0.0, %v439
      %441 = vmatmul.bf16.gmra.mxu0 %v304
      %v442 = vpop.f32.mrf.mxu0
      %v443 = vadd.f32 0.0, %v442
      %v444 = vpop.f32.mrf.mxu0
      %v445 = vadd.f32 0.0, %v444
      %446 = vdwg.mxu0
      %v447 = vsub.f32 %v399, %v433
      %v448 = vsub.f32 %v401, %v435
      %v449 = vpack.c.bf16 %v447, %v447
      %v450 = vpack.c.bf16 %v448, %v448
      %451 = vst [vmem:[#allocation2] sm:$0xf] %v449
      %452 = vst [vmem:[#allocation2 + $0x8] sm:$0xf] %v450
      %v453 = vadd.f32 %v428, %v404
      %v454 = vadd.f32 %v430, %v406
      %v455 = vpack.c.bf16 %v453, %v453
      %v456 = vpack.c.bf16 %v454, %v454
      %457 = vst [vmem:[#allocation2 + $0x10] sm:$0xf] %v455
      %458 = vst [vmem:[#allocation2 + $0x18] sm:$0xf] %v456
      %v459 = vsub.f32 %v409, %v443
      %v460 = vsub.f32 %v411, %v445
      %v461 = vpack.c.bf16 %v459, %v459
      %v462 = vpack.c.bf16 %v460, %v460
      %463 = vst [vmem:[#allocation2 + $0x4] sm:$0xf] %v461
      %464 = vst [vmem:[#allocation2 + $0xc] sm:$0xf] %v462
      %v465 = vadd.f32 %v438, %v414
      %v466 = vadd.f32 %v440, %v416
      %v467 = vpack.c.bf16 %v465, %v465
      %v468 = vpack.c.bf16 %v466, %v466
      %469 = vst [vmem:[#allocation2 + $0x14] sm:$0xf] %v467
      %470 = vst [vmem:[#allocation2 + $0x1c] sm:$0xf] %v468
      %v471 = vld [vmem:[%s2] sm:$0xf]
      %v472 = vld [vmem:[%s2 + $0x4] sm:$0xf]
      %v473 = vld [vmem:[%s2 + $0x8] sm:$0xf]
      %v474 = vld [vmem:[%s2 + $0xc] sm:$0xf]
      %v475 = vld [vmem:[%s2 + $0x10] sm:$0xf]
      %v476 = vld [vmem:[%s2 + $0x14] sm:$0xf]
      %v477 = vld [vmem:[%s2 + $0x18] sm:$0xf]
      %v478 = vld [vmem:[%s2 + $0x1c] sm:$0xf]
      %v479 = vld [vmem:[#allocation2] sm:$0xff]
      %v480 = vld [vmem:[#allocation2 + $0x8] sm:$0xff]
      %v481 = vld [vmem:[#allocation2 + $0x10] sm:$0xff]
      %v482 = vld [vmem:[#allocation2 + $0x18] sm:$0xff]
      %v483 = vld [vmem:[%s3] sm:$0xff]
      %v484 = vld [vmem:[%s3 + $0x8] sm:$0xff]
      %v485 = vld [vmem:[%s3 + $0x10] sm:$0xff]
      %v486 = vld [vmem:[%s3 + $0x18] sm:$0xff]
      %v487 = vld [vmem:[%s3 + $0x20] sm:$0xff]
      %v488 = vld [vmem:[%s3 + $0x28] sm:$0xff]
      %v489 = vld [vmem:[%s3 + $0x30] sm:$0xff]
      %v490 = vld [vmem:[%s3 + $0x38] sm:$0xff]
      %492 = vset.pattern.permute.xlu0 0
      %493 = vperm.xlu0 %492, %v483
      %v494 = vpop.permute.xlu0 %493
      %497 = vset.pattern.permute.xlu0 0
      %498 = vperm.xlu0 %497, %v484
      %v499 = vpop.permute.xlu0 %498
      %502 = vset.pattern.permute.xlu0 0
      %503 = vperm.xlu0 %502, %v485
      %v504 = vpop.permute.xlu0 %503
      %507 = vset.pattern.permute.xlu0 0
      %508 = vperm.xlu0 %507, %v486
      %v509 = vpop.permute.xlu0 %508
      %512 = vset.pattern.permute.xlu0 0
      %513 = vperm.xlu0 %512, %v487
      %v514 = vpop.permute.xlu0 %513
      %517 = vset.pattern.permute.xlu0 0
      %518 = vperm.xlu0 %517, %v488
      %v519 = vpop.permute.xlu0 %518
      %522 = vset.pattern.permute.xlu0 0
      %523 = vperm.xlu0 %522, %v489
      %v524 = vpop.permute.xlu0 %523
      %527 = vset.pattern.permute.xlu0 0
      %528 = vperm.xlu0 %527, %v490
      %v529 = vpop.permute.xlu0 %528
      %v539 = vunpack.c.l.b16 %v471
      %v540 = vunpack.c.l.b16 %v472
      %v541 = vunpack.c.l.b16 %v473
      %v542 = vunpack.c.l.b16 %v474
      %v543 = vunpack.c.l.b16 %v475
      %v544 = vunpack.c.l.b16 %v476
      %v545 = vunpack.c.l.b16 %v477
      %v546 = vunpack.c.l.b16 %v478
      %v547 = vpack.c.b16 %v540, %v539
      %v548 = vpack.c.b16 %v542, %v541
      %v549 = vpack.c.b16 %v544, %v543
      %v550 = vpack.c.b16 %v546, %v545
      %v555 = vunpack.c.l.b16 %v479
      %v556 = vunpack.c.h.b16 %v479
      %v557 = vunpack.c.l.b16 %v480
      %v558 = vunpack.c.h.b16 %v480
      %v559 = vunpack.c.l.b16 %v481
      %v560 = vunpack.c.h.b16 %v481
      %v561 = vunpack.c.l.b16 %v482
      %v562 = vunpack.c.h.b16 %v482
      %v563 = vpack.c.b16 %v557, %v555
      %v564 = vpack.c.b16 %v558, %v556
      %v565 = vpack.c.b16 %v561, %v559
      %v566 = vpack.c.b16 %v562, %v560
      %vm571 = vcmask 261120
      %v573 = vsel %vm571, %v547, 0
      %v576 = vsel %vm571, %v548, 0
      %v579 = vsel %vm571, %v549, 0
      %v582 = vsel %vm571, %v550, 0
      %584 = vmatpush.bf16.msra.mxu0 0
      %585 = vmatpush.bf16.msra.mxu0 0
      %586 = vmatpush.bf16.msra.mxu0 0
      %587 = vmatpush.bf16.msra.mxu0 0
      %588 = vmatpush.bf16.msra.mxu0 0
      %589 = vmatpush.bf16.msra.mxu0 0
      %590 = vmatpush.bf16.msra.mxu0 %v565
      %591 = vmatpush.bf16.msra.mxu0 %v563
      %592 = vmatmul.bf16.gmra.mxu0 %v573
      %v593 = vpop.f32.mrf.mxu0
      %v594 = vadd.f32 %v494, %v593
      %v595 = vpop.f32.mrf.mxu0
      %v596 = vadd.f32 %v499, %v595
      %597 = vmatmul.bf16.gmra.mxu0 %v576
      %v598 = vpop.f32.mrf.mxu0
      %v599 = vadd.f32 %v504, %v598
      %v600 = vpop.f32.mrf.mxu0
      %v601 = vadd.f32 %v509, %v600
      %602 = vmatmul.bf16.gmra.mxu0 %v579
      %v603 = vpop.f32.mrf.mxu0
      %v604 = vadd.f32 %v514, %v603
      %v605 = vpop.f32.mrf.mxu0
      %v606 = vadd.f32 %v519, %v605
      %607 = vmatmul.bf16.gmra.mxu0 %v582
      %v608 = vpop.f32.mrf.mxu0
      %v609 = vadd.f32 %v524, %v608
      %v610 = vpop.f32.mrf.mxu0
      %v611 = vadd.f32 %v529, %v610
      %612 = vdwg.mxu0
      %613 = vmatpush.bf16.msra.mxu0 0
      %614 = vmatpush.bf16.msra.mxu0 0
      %615 = vmatpush.bf16.msra.mxu0 0
      %616 = vmatpush.bf16.msra.mxu0 0
      %617 = vmatpush.bf16.msra.mxu0 0
      %618 = vmatpush.bf16.msra.mxu0 0
      %619 = vmatpush.bf16.msra.mxu0 %v566
      %620 = vmatpush.bf16.msra.mxu0 %v564
      %621 = vmatmul.bf16.gmra.mxu0 %v573
      %v622 = vpop.f32.mrf.mxu0
      %v623 = vadd.f32 %v494, %v622
      %v624 = vpop.f32.mrf.mxu0
      %v625 = vadd.f32 %v499, %v624
      %626 = vmatmul.bf16.gmra.mxu0 %v576
      %v627 = vpop.f32.mrf.mxu0
      %v628 = vadd.f32 %v504, %v627
      %v629 = vpop.f32.mrf.mxu0
      %v630 = vadd.f32 %v509, %v629
      %631 = vmatmul.bf16.gmra.mxu0 %v579
      %v632 = vpop.f32.mrf.mxu0
      %v633 = vadd.f32 %v514, %v632
      %v634 = vpop.f32.mrf.mxu0
      %v635 = vadd.f32 %v519, %v634
      %636 = vmatmul.bf16.gmra.mxu0 %v582
      %v637 = vpop.f32.mrf.mxu0
      %v638 = vadd.f32 %v524, %v637
      %v639 = vpop.f32.mrf.mxu0
      %v640 = vadd.f32 %v529, %v639
      %641 = vdwg.mxu0
      %v642 = vmax.f32 %v594, 0.0
      %v643 = vmax.f32 %v623, 0.0
      %v644 = vmax.f32 %v596, 0.0
      %v645 = vmax.f32 %v625, 0.0
      %v646 = vmax.f32 %v599, 0.0
      %v647 = vmax.f32 %v628, 0.0
      %v648 = vmax.f32 %v601, 0.0
      %v649 = vmax.f32 %v630, 0.0
      %v650 = vmax.f32 %v604, 0.0
      %v651 = vmax.f32 %v633, 0.0
      %v652 = vmax.f32 %v606, 0.0
      %v653 = vmax.f32 %v635, 0.0
      %v654 = vmax.f32 %v609, 0.0
      %v655 = vmax.f32 %v638, 0.0
      %v656 = vmax.f32 %v611, 0.0
      %v657 = vmax.f32 %v640, 0.0
      %vm658 = vcmp.gt.f32.partialorder %v642, 0.01
      %vm659 = vcmp.gt.f32.partialorder %v643, 0.01
      %vm660 = vcmp.gt.f32.partialorder %v644, 0.01
      %vm661 = vcmp.gt.f32.partialorder %v645, 0.01
      %vm662 = vcmp.gt.f32.partialorder %v646, 0.01
      %vm663 = vcmp.gt.f32.partialorder %v647, 0.01
      %vm664 = vcmp.gt.f32.partialorder %v648, 0.01
      %vm665 = vcmp.gt.f32.partialorder %v649, 0.01
      %vm666 = vcmp.gt.f32.partialorder %v650, 0.01
      %vm667 = vcmp.gt.f32.partialorder %v651, 0.01
      %vm668 = vcmp.gt.f32.partialorder %v652, 0.01
      %vm669 = vcmp.gt.f32.partialorder %v653, 0.01
      %vm670 = vcmp.gt.f32.partialorder %v654, 0.01
      %vm671 = vcmp.gt.f32.partialorder %v655, 0.01
      %vm672 = vcmp.gt.f32.partialorder %v656, 0.01
      %vm673 = vcmp.gt.f32.partialorder %v657, 0.01
      %v674 = vsub.f32 %v642, 0.01
      %v675 = vsub.f32 %v643, 0.01
      %v676 = vsub.f32 %v644, 0.01
      %v677 = vsub.f32 %v645, 0.01
      %v678 = vsub.f32 %v646, 0.01
      %v679 = vsub.f32 %v647, 0.01
      %v680 = vsub.f32 %v648, 0.01
      %v681 = vsub.f32 %v649, 0.01
      %v682 = vsub.f32 %v650, 0.01
      %v683 = vsub.f32 %v651, 0.01
      %v684 = vsub.f32 %v652, 0.01
      %v685 = vsub.f32 %v653, 0.01
      %v686 = vsub.f32 %v654, 0.01
      %v687 = vsub.f32 %v655, 0.01
      %v688 = vsub.f32 %v656, 0.01
      %v689 = vsub.f32 %v657, 0.01
      %vm690 = vcmp.lt.f32.partialorder %v642, -0.01
      %vm691 = vcmp.lt.f32.partialorder %v643, -0.01
      %vm692 = vcmp.lt.f32.partialorder %v644, -0.01
      %vm693 = vcmp.lt.f32.partialorder %v645, -0.01
      %vm694 = vcmp.lt.f32.partialorder %v646, -0.01
      %vm695 = vcmp.lt.f32.partialorder %v647, -0.01
      %vm696 = vcmp.lt.f32.partialorder %v648, -0.01
      %vm697 = vcmp.lt.f32.partialorder %v649, -0.01
      %vm698 = vcmp.lt.f32.partialorder %v650, -0.01
      %vm699 = vcmp.lt.f32.partialorder %v651, -0.01
      %vm700 = vcmp.lt.f32.partialorder %v652, -0.01
      %vm701 = vcmp.lt.f32.partialorder %v653, -0.01
      %vm702 = vcmp.lt.f32.partialorder %v654, -0.01
      %vm703 = vcmp.lt.f32.partialorder %v655, -0.01
      %vm704 = vcmp.lt.f32.partialorder %v656, -0.01
      %vm705 = vcmp.lt.f32.partialorder %v657, -0.01
      %v706 = vadd.f32 %v642, 0.01
      %v707 = vadd.f32 %v643, 0.01
      %v708 = vadd.f32 %v644, 0.01
      %v709 = vadd.f32 %v645, 0.01
      %v710 = vadd.f32 %v646, 0.01
      %v711 = vadd.f32 %v647, 0.01
      %v712 = vadd.f32 %v648, 0.01
      %v713 = vadd.f32 %v649, 0.01
      %v714 = vadd.f32 %v650, 0.01
      %v715 = vadd.f32 %v651, 0.01
      %v716 = vadd.f32 %v652, 0.01
      %v717 = vadd.f32 %v653, 0.01
      %v718 = vadd.f32 %v654, 0.01
      %v719 = vadd.f32 %v655, 0.01
      %v720 = vadd.f32 %v656, 0.01
      %v721 = vadd.f32 %v657, 0.01
      %v722 = vsel %vm690, %v706, 0.0
      %v723 = vsel %vm691, %v707, 0.0
      %v724 = vsel %vm692, %v708, 0.0
      %v725 = vsel %vm693, %v709, 0.0
      %v726 = vsel %vm694, %v710, 0.0
      %v727 = vsel %vm695, %v711, 0.0
      %v728 = vsel %vm696, %v712, 0.0
      %v729 = vsel %vm697, %v713, 0.0
      %v730 = vsel %vm698, %v714, 0.0
      %v731 = vsel %vm699, %v715, 0.0
      %v732 = vsel %vm700, %v716, 0.0
      %v733 = vsel %vm701, %v717, 0.0
      %v734 = vsel %vm702, %v718, 0.0
      %v735 = vsel %vm703, %v719, 0.0
      %v736 = vsel %vm704, %v720, 0.0
      %v737 = vsel %vm705, %v721, 0.0
      %v738 = vsel %vm658, %v674, %v722
      %v739 = vsel %vm659, %v675, %v723
      %v740 = vsel %vm660, %v676, %v724
      %v741 = vsel %vm661, %v677, %v725
      %v742 = vsel %vm662, %v678, %v726
      %v743 = vsel %vm663, %v679, %v727
      %v744 = vsel %vm664, %v680, %v728
      %v745 = vsel %vm665, %v681, %v729
      %v746 = vsel %vm666, %v682, %v730
      %v747 = vsel %vm667, %v683, %v731
      %v748 = vsel %vm668, %v684, %v732
      %v749 = vsel %vm669, %v685, %v733
      %v750 = vsel %vm670, %v686, %v734
      %v751 = vsel %vm671, %v687, %v735
      %v752 = vsel %vm672, %v688, %v736
      %v753 = vsel %vm673, %v689, %v737
      %v754 = vld [vmem:[%s4] sm:$0xf]
      %v755 = vld [vmem:[%s4 + $0x4] sm:$0xf]
      %v756 = vld [vmem:[%s4 + $0x8] sm:$0xf]
      %v757 = vld [vmem:[%s4 + $0xc] sm:$0xf]
      %v758 = vpack.c.bf16 %v740, %v738
      %v759 = vpack.c.bf16 %v741, %v739
      %v760 = vpack.c.bf16 %v744, %v742
      %v761 = vpack.c.bf16 %v745, %v743
      %v762 = vpack.c.bf16 %v748, %v746
      %v763 = vpack.c.bf16 %v749, %v747
      %v764 = vpack.c.bf16 %v752, %v750
      %v765 = vpack.c.bf16 %v753, %v751
      %v766 = vld [vmem:[%s5] sm:$0xff]
      %v767 = vld [vmem:[%s5 + $0x8] sm:$0xff]
      %v768 = vld [vmem:[%s5 + $0x10] sm:$0xff]
      %v769 = vld [vmem:[%s5 + $0x18] sm:$0xff]
      %771 = vset.pattern.permute.xlu0 0
      %772 = vperm.xlu0 %771, %v766
      %v773 = vpop.permute.xlu0 %772
      %776 = vset.pattern.permute.xlu0 0
      %777 = vperm.xlu0 %776, %v767
      %v778 = vpop.permute.xlu0 %777
      %781 = vset.pattern.permute.xlu0 0
      %782 = vperm.xlu0 %781, %v768
      %v783 = vpop.permute.xlu0 %782
      %786 = vset.pattern.permute.xlu0 0
      %787 = vperm.xlu0 %786, %v769
      %v788 = vpop.permute.xlu0 %787
      %v794 = vunpack.c.l.b16 %v754
      %v795 = vunpack.c.l.b16 %v755
      %v796 = vunpack.c.l.b16 %v756
      %v797 = vunpack.c.l.b16 %v757
      %v798 = vpack.c.b16 %v795, %v794
      %v799 = vpack.c.b16 %v797, %v796
      %vm800 = vcmask 523264
      %v802 = vsel %vm800, %v798, 0
      %v805 = vsel %vm800, %v799, 0
      %807 = vmatpush.bf16.msra.mxu0 0
      %808 = vmatpush.bf16.msra.mxu0 0
      %809 = vmatpush.bf16.msra.mxu0 0
      %810 = vmatpush.bf16.msra.mxu0 0
      %811 = vmatpush.bf16.msra.mxu0 %v764
      %812 = vmatpush.bf16.msra.mxu0 %v762
      %813 = vmatpush.bf16.msra.mxu0 %v760
      %814 = vmatpush.bf16.msra.mxu0 %v758
      %815 = vmatmul.bf16.gmra.mxu0 %v802
      %v816 = vpop.f32.mrf.mxu0
      %v817 = vadd.f32 %v773, %v816
      %v818 = vpop.f32.mrf.mxu0
      %v819 = vadd.f32 %v778, %v818
      %820 = vmatmul.bf16.gmra.mxu0 %v805
      %v821 = vpop.f32.mrf.mxu0
      %v822 = vadd.f32 %v783, %v821
      %v823 = vpop.f32.mrf.mxu0
      %v824 = vadd.f32 %v788, %v823
      %825 = vdwg.mxu0
      %826 = vmatpush.bf16.msra.mxu0 0
      %827 = vmatpush.bf16.msra.mxu0 0
      %828 = vmatpush.bf16.msra.mxu0 0
      %829 = vmatpush.bf16.msra.mxu0 0
      %830 = vmatpush.bf16.msra.mxu0 %v765
      %831 = vmatpush.bf16.msra.mxu0 %v763
      %832 = vmatpush.bf16.msra.mxu0 %v761
      %833 = vmatpush.bf16.msra.mxu0 %v759
      %834 = vmatmul.bf16.gmra.mxu0 %v802
      %v835 = vpop.f32.mrf.mxu0
      %v836 = vadd.f32 %v773, %v835
      %v837 = vpop.f32.mrf.mxu0
      %v838 = vadd.f32 %v778, %v837
      %839 = vmatmul.bf16.gmra.mxu0 %v805
      %v840 = vpop.f32.mrf.mxu0
      %v841 = vadd.f32 %v783, %v840
      %v842 = vpop.f32.mrf.mxu0
      %v843 = vadd.f32 %v788, %v842
      %844 = vdwg.mxu0
      %v845 = vmax.f32 %v817, 0.0
      %v846 = vmax.f32 %v836, 0.0
      %v847 = vmax.f32 %v819, 0.0
      %v848 = vmax.f32 %v838, 0.0
      %v849 = vmax.f32 %v822, 0.0
      %v850 = vmax.f32 %v841, 0.0
      %v851 = vmax.f32 %v824, 0.0
      %v852 = vmax.f32 %v843, 0.0
      %v853 = vpack.c.bf16 %v846, %v845
      %v854 = vpack.c.bf16 %v848, %v847
      %v855 = vpack.c.bf16 %v850, %v849
      %v856 = vpack.c.bf16 %v852, %v851
      %857 = vst [vmem:[#allocation3] sm:$0xf] %v853
      %858 = vst [vmem:[#allocation3 + $0x4] sm:$0xf] %v854
      %859 = vst [vmem:[#allocation3 + $0x8] sm:$0xf] %v855
      %860 = vst [vmem:[#allocation3 + $0xc] sm:$0xf] %v856
      %v865 = vrot.slane %v853, 4
      %v866 = vrot.slane %v854, 4
      %v867 = vrot.slane %v855, 4
      %v868 = vrot.slane %v856, 4
      %873 = vst [vmem:[#allocation3 + $0x10] sm:$0xf] %v865
      %874 = vst [vmem:[#allocation3 + $0x14] sm:$0xf] %v866
      %875 = vst [vmem:[#allocation3 + $0x18] sm:$0xf] %v867
      %876 = vst [vmem:[#allocation3 + $0x1c] sm:$0xf] %v868
      %v877 = vld [vmem:[#allocation3] sm:$0xf]
      %v878 = vld [vmem:[#allocation3 + $0x4] sm:$0xf]
      %v879 = vld [vmem:[#allocation3 + $0x8] sm:$0xf]
      %v880 = vld [vmem:[#allocation3 + $0xc] sm:$0xf]
      %v881 = vld [vmem:[#allocation3 + $0x10] sm:$0xf]
      %v882 = vld [vmem:[#allocation3 + $0x14] sm:$0xf]
      %v883 = vld [vmem:[#allocation3 + $0x18] sm:$0xf]
      %v884 = vld [vmem:[#allocation3 + $0x1c] sm:$0xf]
      %v893 = vunpack.c.l.b16 %v877
      %v894 = vunpack.c.l.b16 %v878
      %v895 = vunpack.c.l.b16 %v879
      %v896 = vunpack.c.l.b16 %v880
      %v897 = vunpack.c.l.b16 %v881
      %v898 = vunpack.c.l.b16 %v882
      %v899 = vunpack.c.l.b16 %v883
      %v900 = vunpack.c.l.b16 %v884
      %v901 = vpack.c.b16 %v894, %v893
      %v902 = vpack.c.b16 %v896, %v895
      %v903 = vpack.c.b16 %v898, %v897
      %v904 = vpack.c.b16 %v900, %v899
      %909 = vmatpush.bf16.msra.mxu0 %v371
      %910 = vmatpush.bf16.msra.mxu0 %v369
      %911 = vmatpush.bf16.msra.mxu0 %v367
      %912 = vmatpush.bf16.msra.mxu0 %v365
      %913 = vmatpush.bf16.msra.mxu0 %v363
      %914 = vmatpush.bf16.msra.mxu0 %v361
      %915 = vmatpush.bf16.msra.mxu0 %v359
      %916 = vmatpush.bf16.msra.mxu0 %v357
      %917 = vmatmul.bf16.gmra.mxu0 %v901
      %v918 = vpop.f32.mrf.mxu0
      %v919 = vadd.f32 0.0, %v918
      %v920 = vpop.f32.mrf.mxu0
      %v921 = vadd.f32 0.0, %v920
      %922 = vmatmul.bf16.gmra.mxu0 %v902
      %v923 = vpop.f32.mrf.mxu0
      %v924 = vadd.f32 0.0, %v923
      %v925 = vpop.f32.mrf.mxu0
      %v926 = vadd.f32 0.0, %v925
      %927 = vmatmul.bf16.gmra.mxu0 %v903
      %v928 = vpop.f32.mrf.mxu0
      %v929 = vadd.f32 0.0, %v928
      %v930 = vpop.f32.mrf.mxu0
      %v931 = vadd.f32 0.0, %v930
      %932 = vmatmul.bf16.gmra.mxu0 %v904
      %v933 = vpop.f32.mrf.mxu0
      %v934 = vadd.f32 0.0, %v933
      %v935 = vpop.f32.mrf.mxu0
      %v936 = vadd.f32 0.0, %v935
      %937 = vdwg.mxu0
      %938 = vmatpush.bf16.msra.mxu0 %v372
      %939 = vmatpush.bf16.msra.mxu0 %v370
      %940 = vmatpush.bf16.msra.mxu0 %v368
      %941 = vmatpush.bf16.msra.mxu0 %v366
      %942 = vmatpush.bf16.msra.mxu0 %v364
      %943 = vmatpush.bf16.msra.mxu0 %v362
      %944 = vmatpush.bf16.msra.mxu0 %v360
      %945 = vmatpush.bf16.msra.mxu0 %v358
      %946 = vmatmul.bf16.gmra.mxu0 %v901
      %v947 = vpop.f32.mrf.mxu0
      %v948 = vadd.f32 0.0, %v947
      %v949 = vpop.f32.mrf.mxu0
      %v950 = vadd.f32 0.0, %v949
      %951 = vmatmul.bf16.gmra.mxu0 %v902
      %v952 = vpop.f32.mrf.mxu0
      %v953 = vadd.f32 0.0, %v952
      %v954 = vpop.f32.mrf.mxu0
      %v955 = vadd.f32 0.0, %v954
      %956 = vmatmul.bf16.gmra.mxu0 %v903
      %v957 = vpop.f32.mrf.mxu0
      %v958 = vadd.f32 0.0, %v957
      %v959 = vpop.f32.mrf.mxu0
      %v960 = vadd.f32 0.0, %v959
      %961 = vmatmul.bf16.gmra.mxu0 %v904
      %v962 = vpop.f32.mrf.mxu0
      %v963 = vadd.f32 0.0, %v962
      %v964 = vpop.f32.mrf.mxu0
      %v965 = vadd.f32 0.0, %v964
      %966 = vdwg.mxu0
      %v967 = vadd.f32 %v919, %v953
      %v968 = vadd.f32 %v921, %v955
      %969 = vst [vmem:[%s258] sm:$0xff] %v967
      %970 = vst [vmem:[%s258 + $0x8] sm:$0xff] %v968
      %v971 = vsub.f32 %v924, %v948
      %v972 = vsub.f32 %v926, %v950
      %973 = vst [vmem:[%s258 + $0x10] sm:$0xff] %v971
      %974 = vst [vmem:[%s258 + $0x18] sm:$0xff] %v972
      %v975 = vadd.f32 %v929, %v963
      %v976 = vadd.f32 %v931, %v965
      %s977 = scalar_lea.vmem %s258, 32
      %978 = vst [vmem:[%s977] sm:$0xff] %v975
      %979 = vst [vmem:[%s977 + $0x8] sm:$0xff] %v976
      %v980 = vsub.f32 %v934, %v958
      %v981 = vsub.f32 %v936, %v960
      %982 = vst [vmem:[%s977 + $0x10] sm:$0xff] %v980
      %983 = vst [vmem:[%s977 + $0x18] sm:$0xff] %v981
      %s984 = smul.u32 2, %s17
      %p985 = scmp.lt.s32.totalorder %s984, 3
      %s986 = scalar_select %p985, %s984, 3
      %s987 = smul.addr %s986, 4
      %s988 = smul.addr %s987, 8
      %s989 = scalar_lea.vmem %s6, %s988
      // Predicated region
      $region45: #{frets_block_forward.1} parent=43 // pred_check
        %p990 = pneg %p166
      $region46: #{frets_block_forward.1} parent=43 // pred_check_branch
        %992 = sbr.rel (%p990) target = $region48
      $region47: #{frets_block_forward.1} parent=43 // pred_region
        %s993 = smul.u32 2, %s17
      $region48: #{frets_block_forward.1} parent=43 // pred_fallthru
        _
    $region44: #{frets_block_forward.1} parent=5 // pred_fallthru
      _
    %p994 = scmp.le.s32.totalorder 2, %s12
    // Predicated region
    $region49: #{frets_block_forward.1} parent=5 // pred_check
      %p995 = pneg %p994
    $region50: #{frets_block_forward.1} parent=5 // pred_check_branch
      %997 = sbr.rel (%p995) target = $region52
    $region51: #{frets_block_forward.1} parent=5 // pred_region
      %s998 = ssub.s32 %s12, 2
      // Predicated region
      $region53: #{frets_block_forward.1} parent=51 // pred_check
        %p999 = pneg %p172
      $region54: #{frets_block_forward.1} parent=51 // pred_check_branch
        %1001 = sbr.rel (%p999) target = $region56
      $region55: #{frets_block_forward.1} parent=51 // pred_region
        %s1002 = smul.u32 2, %s18
        %p1003 = scmp.lt.s32.totalorder %s1002, 3
        %s1004 = scalar_select %p1003, %s1002, 3
        %s1005 = smul.addr %s1004, 4
        %s1006 = smul.addr %s1005, 8
        %s1007 = scalar_lea.vmem %s6, %s1006
      $region56: #{frets_block_forward.1} parent=51 // pred_fallthru
        _
    $region52: #{frets_block_forward.1} parent=5 // pred_fallthru
      _
  $region6: #{frets_block_forward.1} parent=0 // loop_footer
    %s16 = sadd.s32 1, %s12
  $region7: #{frets_block_forward.1} parent=0 // loop_footer_branch
    %11 = sbr.rel target = $region3
  $region8: #{frets_block_forward.1} parent=0 // loop_exit
    _

</llo_original>
